<compile_context>
chip_gen: v7x
topology: tpu7x:2x2x1
jax: 0.10.0
libtpu: 0.0.40
codegen_flags: <defaults>
</compile_context>

<pallas_src>
import jax
import jax.numpy as jnp
from jax.experimental import pallas as pl
from jax.experimental.pallas import tpu as pltpu

H1, H2 = 16, 8
_SUB = 16  # sublane granule for batch tiles (multiple of 16 => bf16-safe)


def _mlp_kernel(x_ref, w1_ref, b1_ref, w2_ref, b2_ref, w3_ref, b3_ref, o_ref):
    # One batch tile per grid step; all three matmuls + both ReLUs fused so
    # intermediates never leave VMEM. Weights/biases are VMEM-resident
    # (constant index_maps). Purely row-wise: padded trailing rows compute
    # junk but never contaminate real rows and are masked on writeback.
    x = x_ref[...]                                                     # (TB, p*In)
    h1 = jnp.dot(x, w1_ref[...], preferred_element_type=jnp.float32) + b1_ref[...]
    h1 = jnp.maximum(h1, 0.0)                                          # (TB, p*16)
    h2 = jnp.dot(h1, w2_ref[...], preferred_element_type=jnp.float32) + b2_ref[...]
    h2 = jnp.maximum(h2, 0.0)                                          # (TB, p*8)
    out = jnp.dot(h2, w3_ref[...], preferred_element_type=jnp.float32) + b3_ref[...]
    o_ref[...] = out.astype(o_ref.dtype)                               # (TB, p*Out)


def _round_up(a, m):
    return ((a + m - 1) // m) * m


def _block_diag(w, p):
    """p-fold block-diagonal expansion of a (fan_in, fan_out) weight (tiny)."""
    if p == 1:
        return w
    fi, fo = w.shape
    bd = jnp.zeros((p, fi, p, fo), w.dtype)
    idx = jnp.arange(p)
    bd = bd.at[idx, :, idx, :].set(w)          # bd[i, :, i, :] = w
    return bd.reshape(p * fi, p * fo)


def feed_forward_net(x, params, *, block_rows=32768, out_dtype=jnp.float32):
    """x: (batch, seq, n_features) in f32 or bf16. Returns (batch, output_size).

    block_rows: batch-tile height in *original* rows. Default 32768 keeps the
    per-step DMA ~10x the fixed grid-step overhead and still fits v5e's 16 MiB
    scoped-VMEM default; larger values are honored via vmem_limit_bytes.
    """
    w1, b1, w2, b2, w3, b3 = params
    batch = x.shape[0]
    x2d = x.reshape(batch, -1)            # == torch X.view(X.size(0), -1); free
    in_size = x2d.shape[1]
    out_size = w3.shape[1]

    # ---- lane packing: p batch rows per "packed row" -> lane-dense tiles.
    pack = 1
    for p in (8, 4, 2):
        if batch % p == 0 and batch // p >= 8:
            pack = p
            break
    rows = batch // pack
    in_p, out_p = pack * in_size, pack * out_size
    xp = x2d.reshape(rows, in_p)          # contiguous reshape -> no copy

    # Block-diagonal weights / tiled biases: tiny, resident across all steps.
    w1p, b1p = _block_diag(w1, pack), jnp.tile(b1, (1, pack))
    w2p, b2p = _block_diag(w2, pack), jnp.tile(b2, (1, pack))
    w3p, b3p = _block_diag(w3, pack), jnp.tile(b3, (1, pack))
    if xp.dtype == jnp.bfloat16:
        # X was already stored bf16 by the caller (we never cast X here: a
        # wrapper cast would ADD an HBM pass). Match W1 -> bf16 MXU, f32 acc.
        w1p = w1p.astype(jnp.bfloat16)

    # ---- batch-tile selection (in packed rows).
    max_tbr = max(block_rows // pack, _SUB)
    max_tbr = (max_tbr // _SUB) * _SUB
    if rows <= max_tbr:
        # Small batch: prefer an even number (>=2) of grid steps so the
        # "parallel" batch axis can be sharded across v7x's two TensorCores;
        # fall back to one full-extent block if the batch is too small.
        half = _round_up(pl.cdiv(rows, 2), _SUB)
        tbr = half if half < rows else rows
    else:
        tbr = max_tbr
    grid = (pl.cdiv(rows, tbr),)

    # ---- advisory cost + VMEM budget for the chosen tile.
    weight_bytes = sum(int(a.size) * a.dtype.itemsize
                       for a in (w1p, b1p, w2p, b2p, w3p, b3p))
    out_itemsize = jnp.dtype(out_dtype).itemsize
    cost = pl.CostEstimate(
        flops=2 * batch * (in_size * H1 + H1 * H2 + H2 * out_size),
        bytes_accessed=batch * in_size * xp.dtype.itemsize
        + batch * out_size * out_itemsize + weight_bytes,
        transcendentals=0,
    )
    vmem_need = (2 * tbr * (in_p * xp.dtype.itemsize + out_p * out_itemsize)
                 + 2 * weight_bytes)
    # >= the 16 MiB v5e scoped default, capped well under v7x's 64 MiB physical.
    vmem_limit = min(max(vmem_need + (4 << 20), 16 << 20), 56 << 20)

    def resident(shape):
        return pl.BlockSpec(shape, lambda i: (0, 0))

    out = pl.pallas_call(
        _mlp_kernel,
        out_shape=jax.ShapeDtypeStruct((rows, out_p), out_dtype),
        grid=grid,
        in_specs=[
            pl.BlockSpec((tbr, in_p), lambda i: (i, 0)),   # pipelined X tiles
            resident(w1p.shape), resident(b1p.shape),
            resident(w2p.shape), resident(b2p.shape),
            resident(w3p.shape), resident(b3p.shape),
        ],
        out_specs=pl.BlockSpec((tbr, out_p), lambda i: (i, 0)),
        compiler_params=pltpu.CompilerParams(
            # "parallel" lets v7x shard the batch axis over its 2 TensorCores
            # (no-op on single-TC v5e/v6e). If a v7x profile shows one idle TC,
            # switch this to pltpu.CORE_PARALLEL.
            dimension_semantics=("parallel",),
            vmem_limit_bytes=vmem_limit,
        ),
        cost_estimate=cost,
    )(xp, w1p, b1p, w2p, b2p, w3p, b3p)
    return out.reshape(batch, out_size)   # contiguous un-pack; free


def init_params(key, input_size, output_size):
    """Deterministic synthetic init (PyTorch-Linear-like uniform fan-in scaling)."""
    ks = jax.random.split(key, 6)

    def lin(kw, kb, fan_in, fan_out):
        bound = 1.0 / jnp.sqrt(fan_in)
        w = jax.random.uniform(kw, (fan_in, fan_out), jnp.float32, -bound, bound)
        b = jax.random.uniform(kb, (1, fan_out), jnp.float32, -bound, bound)
        return w, b

    w1, b1 = lin(ks[0], ks[1], input_size, H1)
    w2, b2 = lin(ks[2], ks[3], H1, H2)
    w3, b3 = lin(ks[4], ks[5], H2, output_size)
    return (w1, b1, w2, b2, w3, b3)


def _reference(x, params):
    w1, b1, w2, b2, w3, b3 = params
    x2d = x.reshape(x.shape[0], -1)
    h = jnp.maximum(x2d @ w1 + b1, 0.0)
    h = jnp.maximum(h @ w2 + b2, 0.0)
    return h @ w3 + b3


if __name__ == "__main__":
    key = jax.random.PRNGKey(0)
    k1, k2, k3, kp = jax.random.split(key, 4)

    seq, n_feat = 8, 4                    # multivariate time-series window
    input_size = seq * n_feat             # 32 after flatten
    output_size = 4
    params = init_params(kp, input_size, output_size)

    # --- case 1: tiny batch, single full-block grid step, f32 (exact) ---
    x = jax.random.normal(k1, (8, seq, n_feat), jnp.float32)
    out = jax.block_until_ready(feed_forward_net(x, params))
    assert out.shape == (8, output_size)
    assert jnp.allclose(out, _reference(x, params), atol=1e-5, rtol=1e-5)

    # --- case 2: multi-step pipelined grid (block_rows forces 4 steps), f32 ---
    xb = jax.random.normal(k2, (512, seq, n_feat), jnp.float32)
    out_b = jax.block_until_ready(feed_forward_net(xb, params, block_rows=128))
    assert out_b.shape == (512, output_size)
    assert jnp.allclose(out_b, _reference(xb, params), atol=1e-5, rtol=1e-5)

    # --- case 3: batch not a multiple of the tile -> trailing-block padding,
    #             plus the >=2-step small-batch split (v7x megacore path) ---
    xc = jax.random.normal(k3, (200, seq, n_feat), jnp.float32)
    out_c = jax.block_until_ready(feed_forward_net(xc, params))
    assert out_c.shape == (200, output_size)
    assert jnp.allclose(out_c, _reference(xc, params), atol=1e-5, rtol=1e-5)

    # --- case 4: X already stored bf16 at the source (no wrapper cast) and
    #             bf16 output stream; looser tolerance ---
    xd = xb.astype(jnp.bfloat16)
    out_d = jax.block_until_ready(
        feed_forward_net(xd, params, block_rows=128, out_dtype=jnp.bfloat16)
    )
    assert out_d.shape == (512, output_size)
    assert jnp.allclose(out_d.astype(jnp.float32), _reference(xb, params),
                        atol=5e-2, rtol=5e-2)

    print("KERNEL_OK")
</pallas_src>

<mosaic_0001>
module attributes {stable_mosaic.version = 11 : i64} {
  func.func @_mlp_kernel(%arg0: i32, %arg1: memref<8x32xf32, #tpu.memory_space<vmem>>, %arg2: memref<32x16xf32, #tpu.memory_space<vmem>>, %arg3: memref<1x16xf32, #tpu.memory_space<vmem>>, %arg4: memref<16x8xf32, #tpu.memory_space<vmem>>, %arg5: memref<1x8xf32, #tpu.memory_space<vmem>>, %arg6: memref<8x4xf32, #tpu.memory_space<vmem>>, %arg7: memref<1x4xf32, #tpu.memory_space<vmem>>, %arg8: memref<8x4xf32, #tpu.memory_space<vmem>>) attributes {dimension_semantics = [#tpu.dimension_semantics<parallel>], iteration_bounds = array<i64: 1>, scalar_prefetch = 0 : i64, scratch_operands = 0 : i64, tpu.core_type = #tpu.core_type<tc>, window_params = [{transform_indices = @transform_0, window_bounds = array<i64: 8, 32>}, {pipeline_mode = #tpu.pipeline_mode<synchronous>, transform_indices = @transform_1, window_bounds = array<i64: 32, 16>}, {pipeline_mode = #tpu.pipeline_mode<synchronous>, transform_indices = @transform_2, window_bounds = array<i64: 1, 16>}, {pipeline_mode = #tpu.pipeline_mode<synchronous>, transform_indices = @transform_3, window_bounds = array<i64: 16, 8>}, {pipeline_mode = #tpu.pipeline_mode<synchronous>, transform_indices = @transform_4, window_bounds = array<i64: 1, 8>}, {pipeline_mode = #tpu.pipeline_mode<synchronous>, transform_indices = @transform_5, window_bounds = array<i64: 8, 4>}, {pipeline_mode = #tpu.pipeline_mode<synchronous>, transform_indices = @transform_6, window_bounds = array<i64: 1, 4>}, {transform_indices = @transform_7, window_bounds = array<i64: 8, 4>}]} {
    %c0 = arith.constant 0 : index
    %c0_0 = arith.constant 0 : index
    %0 = vector.load %arg1[%c0, %c0_0] : memref<8x32xf32, #tpu.memory_space<vmem>>, vector<8x32xf32>
    %c0_1 = arith.constant 0 : index
    %c0_2 = arith.constant 0 : index
    %1 = vector.load %arg2[%c0_1, %c0_2] : memref<32x16xf32, #tpu.memory_space<vmem>>, vector<32x16xf32>
    %cst = arith.constant dense<0.000000e+00> : vector<8x16xf32>
    %2 = tpu.matmul %0, %1, %cst {dimension_numbers = #tpu.dot_dimension_numbers<[1], [0], [0], [1], [0, 0, 1, 1], [], []>} : vector<8x32xf32>, vector<32x16xf32>, vector<8x16xf32> -> vector<8x16xf32>
    %c0_3 = arith.constant 0 : index
    %c0_4 = arith.constant 0 : index
    %3 = vector.load %arg3[%c0_3, %c0_4] : memref<1x16xf32, #tpu.memory_space<vmem>>, vector<1x16xf32>
    %4 = vector.broadcast %3 : vector<1x16xf32> to vector<8x16xf32>
    %5 = arith.addf %2, %4 : vector<8x16xf32>
    %cst_5 = arith.constant 0.000000e+00 : f32
    %6 = vector.broadcast %cst_5 : f32 to vector<8x16xf32>
    %7 = arith.maximumf %5, %6 : vector<8x16xf32>
    %c0_6 = arith.constant 0 : index
    %c0_7 = arith.constant 0 : index
    %8 = vector.load %arg4[%c0_6, %c0_7] : memref<16x8xf32, #tpu.memory_space<vmem>>, vector<16x8xf32>
    %cst_8 = arith.constant dense<0.000000e+00> : vector<8x8xf32>
    %9 = tpu.matmul %7, %8, %cst_8 {dimension_numbers = #tpu.dot_dimension_numbers<[1], [0], [0], [1], [0, 0, 1, 1], [], []>} : vector<8x16xf32>, vector<16x8xf32>, vector<8x8xf32> -> vector<8x8xf32>
    %c0_9 = arith.constant 0 : index
    %c0_10 = arith.constant 0 : index
    %10 = vector.load %arg5[%c0_9, %c0_10] : memref<1x8xf32, #tpu.memory_space<vmem>>, vector<1x8xf32>
    %11 = vector.broadcast %10 : vector<1x8xf32> to vector<8x8xf32>
    %12 = arith.addf %9, %11 : vector<8x8xf32>
    %cst_11 = arith.constant 0.000000e+00 : f32
    %13 = vector.broadcast %cst_11 : f32 to vector<8x8xf32>
    %14 = arith.maximumf %12, %13 : vector<8x8xf32>
    %c0_12 = arith.constant 0 : index
    %c0_13 = arith.constant 0 : index
    %15 = vector.load %arg6[%c0_12, %c0_13] : memref<8x4xf32, #tpu.memory_space<vmem>>, vector<8x4xf32>
    %cst_14 = arith.constant dense<0.000000e+00> : vector<8x4xf32>
    %16 = tpu.matmul %14, %15, %cst_14 {dimension_numbers = #tpu.dot_dimension_numbers<[1], [0], [0], [1], [0, 0, 1, 1], [], []>} : vector<8x8xf32>, vector<8x4xf32>, vector<8x4xf32> -> vector<8x4xf32>
    %c0_15 = arith.constant 0 : index
    %c0_16 = arith.constant 0 : index
    %17 = vector.load %arg7[%c0_15, %c0_16] : memref<1x4xf32, #tpu.memory_space<vmem>>, vector<1x4xf32>
    %18 = vector.broadcast %17 : vector<1x4xf32> to vector<8x4xf32>
    %19 = arith.addf %16, %18 : vector<8x4xf32>
    %c0_17 = arith.constant 0 : index
    %c0_18 = arith.constant 0 : index
    %20 = vector.load %arg8[%c0_17, %c0_18] : memref<8x4xf32, #tpu.memory_space<vmem>>, vector<8x4xf32>
    tpu.vector_store %arg8[%c0_17, %c0_18], %19 {strides = array<i32>} : memref<8x4xf32, #tpu.memory_space<vmem>>, vector<8x4xf32>,
    return
  }
  func.func @transform_0(%arg0: i32) -> (i32, i32) {
    %c0_i32 = arith.constant 0 : i32
    %c0_i32_0 = arith.constant 0 : i32
    return %arg0, %c0_i32 : i32, i32
  }
  func.func @transform_1(%arg0: i32) -> (i32, i32) {
    %c0_i32 = arith.constant 0 : i32
    %c0_i32_0 = arith.constant 0 : i32
    %c0_i32_1 = arith.constant 0 : i32
    return %c0_i32, %c0_i32_0 : i32, i32
  }
  func.func @transform_2(%arg0: i32) -> (i32, i32) {
    %c0_i32 = arith.constant 0 : i32
    %c0_i32_0 = arith.constant 0 : i32
    %c0_i32_1 = arith.constant 0 : i32
    return %c0_i32, %c0_i32_0 : i32, i32
  }
  func.func @transform_3(%arg0: i32) -> (i32, i32) {
    %c0_i32 = arith.constant 0 : i32
    %c0_i32_0 = arith.constant 0 : i32
    %c0_i32_1 = arith.constant 0 : i32
    return %c0_i32, %c0_i32_0 : i32, i32
  }
  func.func @transform_4(%arg0: i32) -> (i32, i32) {
    %c0_i32 = arith.constant 0 : i32
    %c0_i32_0 = arith.constant 0 : i32
    %c0_i32_1 = arith.constant 0 : i32
    return %c0_i32, %c0_i32_0 : i32, i32
  }
  func.func @transform_5(%arg0: i32) -> (i32, i32) {
    %c0_i32 = arith.constant 0 : i32
    %c0_i32_0 = arith.constant 0 : i32
    %c0_i32_1 = arith.constant 0 : i32
    return %c0_i32, %c0_i32_0 : i32, i32
  }
  func.func @transform_6(%arg0: i32) -> (i32, i32) {
    %c0_i32 = arith.constant 0 : i32
    %c0_i32_0 = arith.constant 0 : i32
    %c0_i32_1 = arith.constant 0 : i32
    return %c0_i32, %c0_i32_0 : i32, i32
  }
  func.func @transform_7(%arg0: i32) -> (i32, i32) {
    %c0_i32 = arith.constant 0 : i32
    %c0_i32_0 = arith.constant 0 : i32
    return %arg0, %c0_i32 : i32, i32
  }
}

</mosaic_0001>

<llo_original>
// kernel: tpu_custom_call.1
$region0: #{tpu_custom_call.1}
  #allocation0 [shape = 'u32[]', space=smem, size = 0x4, offset = 0x4, fixed_abs, tag = 'smem constant byte address 0x4 - core index']
  #allocation1 [shape = 'u32[144,128]{1,0:T(1,128)}', space=vmem, size = 0x12000, scoped, tag = 'internal scratch']
  %s0 = inlined_call_operand.vmem [shape: f32[8,32], index: 0, kind: input, shape index: {}]
  %s1 = inlined_call_operand.vmem [shape: f32[32,16], index: 1, kind: input, shape index: {}]
  %s2 = inlined_call_operand.vmem [shape: f32[1,16], index: 2, kind: input, shape index: {}]
  %s3 = inlined_call_operand.vmem [shape: f32[16,8], index: 3, kind: input, shape index: {}]
  %s4 = inlined_call_operand.vmem [shape: f32[1,8], index: 4, kind: input, shape index: {}]
  %s5 = inlined_call_operand.vmem [shape: f32[8,4], index: 5, kind: input, shape index: {}]
  %s6 = inlined_call_operand.vmem [shape: f32[1,4], index: 6, kind: input, shape index: {}]
  %s7 = inlined_call_operand.vmem [shape: f32[8,4], index: 7, kind: output, shape index: {}]
  %s8 = sld [smem:[#allocation0]]
  $region38: #{tpu_custom_call.1} parent=0
    _
  %s10 = ssub.s32 1, %s8
  %s11 = scalar_select 0, %s10, %s8
  // Predicated region
  $region2: #{tpu_custom_call.1} parent=0 // pred_check
    _
  $region3: #{tpu_custom_call.1} parent=0 // pred_check_branch
    %13 = sbr.rel (0) target = $region5
  $region4: #{tpu_custom_call.1} parent=0 // pred_region
    _
  $region5: #{tpu_custom_call.1} parent=0 // pred_fallthru
    _
  // Predicated region
  $region6: #{tpu_custom_call.1} parent=0 // pred_check
    _
  $region7: #{tpu_custom_call.1} parent=0 // pred_check_branch
    %15 = sbr.rel (0) target = $region9
  $region8: #{tpu_custom_call.1} parent=0 // pred_region
    _
  $region9: #{tpu_custom_call.1} parent=0 // pred_fallthru
    _
  // Predicated region
  $region10: #{tpu_custom_call.1} parent=0 // pred_check
    _
  $region11: #{tpu_custom_call.1} parent=0 // pred_check_branch
    %17 = sbr.rel (0) target = $region13
  $region12: #{tpu_custom_call.1} parent=0 // pred_region
    _
  $region13: #{tpu_custom_call.1} parent=0 // pred_fallthru
    _
  // Predicated region
  $region14: #{tpu_custom_call.1} parent=0 // pred_check
    _
  $region15: #{tpu_custom_call.1} parent=0 // pred_check_branch
    %19 = sbr.rel (0) target = $region17
  $region16: #{tpu_custom_call.1} parent=0 // pred_region
    _
  $region17: #{tpu_custom_call.1} parent=0 // pred_fallthru
    _
  // Predicated region
  $region18: #{tpu_custom_call.1} parent=0 // pred_check
    _
  $region19: #{tpu_custom_call.1} parent=0 // pred_check_branch
    %21 = sbr.rel (0) target = $region21
  $region20: #{tpu_custom_call.1} parent=0 // pred_region
    _
  $region21: #{tpu_custom_call.1} parent=0 // pred_fallthru
    _
  // Predicated region
  $region22: #{tpu_custom_call.1} parent=0 // pred_check
    _
  $region23: #{tpu_custom_call.1} parent=0 // pred_check_branch
    %23 = sbr.rel (0) target = $region25
  $region24: #{tpu_custom_call.1} parent=0 // pred_region
    _
  $region25: #{tpu_custom_call.1} parent=0 // pred_fallthru
    _
  // Predicated region
  $region26: #{tpu_custom_call.1} parent=0 // pred_check
    _
  $region27: #{tpu_custom_call.1} parent=0 // pred_check_branch
    %25 = sbr.rel (0) target = $region29
  $region28: #{tpu_custom_call.1} parent=0 // pred_region
    _
  $region29: #{tpu_custom_call.1} parent=0 // pred_fallthru
    _
  %v26 = vld [vmem:[%s0] sm:$0xff]
  %v27 = vld [vmem:[%s1] sm:$0xff]
  %v28 = vld [vmem:[%s1 + $0x8] sm:$0xff]
  %v29 = vld [vmem:[%s1 + $0x10] sm:$0xff]
  %v30 = vld [vmem:[%s1 + $0x18] sm:$0xff]
  %v31 = vld [vmem:[%s2] sm:$0x1]
  %v33 = vlaneseq
  %v34 = vshrl.u32 %v33, 7
  %v35 = vsub.s32 0, %v34
  %v36 = vrot.slane %v31, %v35
  %vm38 = vcmask 261120
  %v40 = vsel %vm38, %v26, 0
  %42 = vmatprep.subr.mxu0 0.0
  %43 = vmatpush1.msra.mxu0 %v27
  %44 = vmatprep.subr.mxu0 0.0
  %45 = vmatpush1.msra.mxu0 %v28
  %46 = vmatprep.subr.mxu0 0.0
  %47 = vmatpush1.msra.mxu0 %v29
  %48 = vmatprep.subr.mxu0 0.0
  %49 = vmatpush1.msra.mxu0 %v30
  %50 = vmatprep.subr.mxu0 0.0
  %51 = vmatpush1.msra.mxu0 0.0
  %52 = vmatprep.subr.mxu0 0.0
  %53 = vmatpush1.msra.mxu0 0.0
  %54 = vmatprep.subr.mxu0 0.0
  %55 = vmatpush1.msra.mxu0 0.0
  %56 = vmatprep.subr.mxu0 0.0
  %57 = vmatpush1.msra.mxu0 0.0
  %58 = vmatprep.subr.mxu0 0.0
  %59 = vmatpush1.msra.mxu0 0.0
  %60 = vmatprep.subr.mxu0 0.0
  %61 = vmatpush1.msra.mxu0 0.0
  %62 = vmatprep.subr.mxu0 0.0
  %63 = vmatpush1.msra.mxu0 0.0
  %64 = vmatprep.subr.mxu0 0.0
  %65 = vmatpush1.msra.mxu0 0.0
  %66 = vmatprep.subr.mxu0 0.0
  %67 = vmatpush1.msra.mxu0 0.0
  %68 = vmatprep.subr.mxu0 0.0
  %69 = vmatpush1.msra.mxu0 0.0
  %70 = vmatprep.subr.mxu0 0.0
  %71 = vmatpush1.msra.mxu0 0.0
  %72 = vmatprep.subr.mxu0 0.0
  %73 = vmatpush1.msra.mxu0 0.0
  %74 = vmatprep.subr.mxu0 0.0
  %75 = vmatpush1.msra.mxu0 0.0
  %76 = vmatprep.subr.mxu0 0.0
  %77 = vmatpush1.msra.mxu0 0.0
  %78 = vmatprep.subr.mxu0 0.0
  %79 = vmatpush1.msra.mxu0 0.0
  %80 = vmatprep.subr.mxu0 0.0
  %81 = vmatpush1.msra.mxu0 0.0
  %82 = vmatprep.subr.mxu0 0.0
  %83 = vmatpush1.msra.mxu0 0.0
  %84 = vmatprep.subr.mxu0 0.0
  %85 = vmatpush1.msra.mxu0 0.0
  %86 = vmatprep.subr.mxu0 0.0
  %87 = vmatpush1.msra.mxu0 0.0
  %88 = vmatprep.subr.mxu0 0.0
  %89 = vmatpush1.msra.mxu0 0.0
  %90 = vmatprep.subr.mxu0 0.0
  %91 = vmatpush1.msra.mxu0 0.0
  %92 = vmatprep.subr.mxu0 0.0
  %93 = vmatpush1.msra.mxu0 0.0
  %94 = vmatprep.subr.mxu0 0.0
  %95 = vmatpush1.msra.mxu0 0.0
  %96 = vmatprep.subr.mxu0 0.0
  %97 = vmatpush1.msra.mxu0 0.0
  %98 = vmatprep.subr.mxu0 0.0
  %99 = vmatpush1.msra.mxu0 0.0
  %100 = vmatprep.subr.mxu0 0.0
  %101 = vmatpush1.msra.mxu0 0.0
  %102 = vmatprep.subr.mxu0 0.0
  %103 = vmatpush1.msra.mxu0 0.0
  %104 = vmatprep.subr.mxu0 0.0
  %105 = vmatpush1.msra.mxu0 0.0
  %106 = vmatprep.mubr.f32.mxu0 0.0
  %107 = vmatmul.mubr.f32.gmra.mrb[0].mxu0 %v40
  %v108 = vpop.f32.mrb[0].mxu0
  %v109 = vadd.f32 %v36, %v108
  %v110 = vpop.f32.mrb[0].mxu0
  %111 = vdwg.mxu0
  %v112 = vmax.f32 %v109, 0.0
  %v113 = vld [vmem:[%s3] sm:$0xff]
  %v114 = vld [vmem:[%s3 + $0x8] sm:$0xff]
  %v115 = vld [vmem:[%s4] sm:$0x1]
  %v117 = vlaneseq
  %v118 = vshrl.u32 %v117, 7
  %v119 = vsub.s32 0, %v118
  %v120 = vrot.slane %v115, %v119
  %vm122 = vcmask 130048
  %v124 = vsel %vm122, %v112, 0
  %126 = vmatprep.subr.mxu0 0.0
  %127 = vmatpush1.msra.mxu0 %v113
  %128 = vmatprep.subr.mxu0 0.0
  %129 = vmatpush1.msra.mxu0 %v114
  %130 = vmatprep.subr.mxu0 0.0
  %131 = vmatpush1.msra.mxu0 0.0
  %132 = vmatprep.subr.mxu0 0.0
  %133 = vmatpush1.msra.mxu0 0.0
  %134 = vmatprep.subr.mxu0 0.0
  %135 = vmatpush1.msra.mxu0 0.0
  %136 = vmatprep.subr.mxu0 0.0
  %137 = vmatpush1.msra.mxu0 0.0
  %138 = vmatprep.subr.mxu0 0.0
  %139 = vmatpush1.msra.mxu0 0.0
  %140 = vmatprep.subr.mxu0 0.0
  %141 = vmatpush1.msra.mxu0 0.0
  %142 = vmatprep.subr.mxu0 0.0
  %143 = vmatpush1.msra.mxu0 0.0
  %144 = vmatprep.subr.mxu0 0.0
  %145 = vmatpush1.msra.mxu0 0.0
  %146 = vmatprep.subr.mxu0 0.0
  %147 = vmatpush1.msra.mxu0 0.0
  %148 = vmatprep.subr.mxu0 0.0
  %149 = vmatpush1.msra.mxu0 0.0
  %150 = vmatprep.subr.mxu0 0.0
  %151 = vmatpush1.msra.mxu0 0.0
  %152 = vmatprep.subr.mxu0 0.0
  %153 = vmatpush1.msra.mxu0 0.0
  %154 = vmatprep.subr.mxu0 0.0
  %155 = vmatpush1.msra.mxu0 0.0
  %156 = vmatprep.subr.mxu0 0.0
  %157 = vmatpush1.msra.mxu0 0.0
  %158 = vmatprep.subr.mxu0 0.0
  %159 = vmatpush1.msra.mxu0 0.0
  %160 = vmatprep.subr.mxu0 0.0
  %161 = vmatpush1.msra.mxu0 0.0
  %162 = vmatprep.subr.mxu0 0.0
  %163 = vmatpush1.msra.mxu0 0.0
  %164 = vmatprep.subr.mxu0 0.0
  %165 = vmatpush1.msra.mxu0 0.0
  %166 = vmatprep.subr.mxu0 0.0
  %167 = vmatpush1.msra.mxu0 0.0
  %168 = vmatprep.subr.mxu0 0.0
  %169 = vmatpush1.msra.mxu0 0.0
  %170 = vmatprep.subr.mxu0 0.0
  %171 = vmatpush1.msra.mxu0 0.0
  %172 = vmatprep.subr.mxu0 0.0
  %173 = vmatpush1.msra.mxu0 0.0
  %174 = vmatprep.subr.mxu0 0.0
  %175 = vmatpush1.msra.mxu0 0.0
  %176 = vmatprep.subr.mxu0 0.0
  %177 = vmatpush1.msra.mxu0 0.0
  %178 = vmatprep.subr.mxu0 0.0
  %179 = vmatpush1.msra.mxu0 0.0
  %180 = vmatprep.subr.mxu0 0.0
  %181 = vmatpush1.msra.mxu0 0.0
  %182 = vmatprep.subr.mxu0 0.0
  %183 = vmatpush1.msra.mxu0 0.0
  %184 = vmatprep.subr.mxu0 0.0
  %185 = vmatpush1.msra.mxu0 0.0
  %186 = vmatprep.subr.mxu0 0.0
  %187 = vmatpush1.msra.mxu0 0.0
  %188 = vmatprep.subr.mxu0 0.0
  %189 = vmatpush1.msra.mxu0 0.0
  %190 = vmatprep.mubr.f32.mxu0 0.0
  %191 = vmatmul.mubr.f32.gmra.mrb[0].mxu0 %v124
  %v192 = vpop.f32.mrb[0].mxu0
  %v193 = vadd.f32 %v120, %v192
  %v194 = vpop.f32.mrb[0].mxu0
  %195 = vdwg.mxu0
  %v196 = vmax.f32 %v193, 0.0
  %v197 = vld [vmem:[%s5] sm:$0xff]
  %v198 = vld [vmem:[%s6] sm:$0x1]
  %v200 = vlaneseq
  %v201 = vshrl.u32 %v200, 7
  %v202 = vsub.s32 0, %v201
  %v203 = vrot.slane %v198, %v202
  %vm205 = vcmask 64512
  %v207 = vsel %vm205, %v196, 0
  %209 = vmatprep.subr.mxu0 0.0
  %210 = vmatpush1.msra.mxu0 %v197
  %211 = vmatprep.subr.mxu0 0.0
  %212 = vmatpush1.msra.mxu0 0.0
  %213 = vmatprep.subr.mxu0 0.0
  %214 = vmatpush1.msra.mxu0 0.0
  %215 = vmatprep.subr.mxu0 0.0
  %216 = vmatpush1.msra.mxu0 0.0
  %217 = vmatprep.subr.mxu0 0.0
  %218 = vmatpush1.msra.mxu0 0.0
  %219 = vmatprep.subr.mxu0 0.0
  %220 = vmatpush1.msra.mxu0 0.0
  %221 = vmatprep.subr.mxu0 0.0
  %222 = vmatpush1.msra.mxu0 0.0
  %223 = vmatprep.subr.mxu0 0.0
  %224 = vmatpush1.msra.mxu0 0.0
  %225 = vmatprep.subr.mxu0 0.0
  %226 = vmatpush1.msra.mxu0 0.0
  %227 = vmatprep.subr.mxu0 0.0
  %228 = vmatpush1.msra.mxu0 0.0
  %229 = vmatprep.subr.mxu0 0.0
  %230 = vmatpush1.msra.mxu0 0.0
  %231 = vmatprep.subr.mxu0 0.0
  %232 = vmatpush1.msra.mxu0 0.0
  %233 = vmatprep.subr.mxu0 0.0
  %234 = vmatpush1.msra.mxu0 0.0
  %235 = vmatprep.subr.mxu0 0.0
  %236 = vmatpush1.msra.mxu0 0.0
  %237 = vmatprep.subr.mxu0 0.0
  %238 = vmatpush1.msra.mxu0 0.0
  %239 = vmatprep.subr.mxu0 0.0
  %240 = vmatpush1.msra.mxu0 0.0
  %241 = vmatprep.subr.mxu0 0.0
  %242 = vmatpush1.msra.mxu0 0.0
  %243 = vmatprep.subr.mxu0 0.0
  %244 = vmatpush1.msra.mxu0 0.0
  %245 = vmatprep.subr.mxu0 0.0
  %246 = vmatpush1.msra.mxu0 0.0
  %247 = vmatprep.subr.mxu0 0.0
  %248 = vmatpush1.msra.mxu0 0.0
  %249 = vmatprep.subr.mxu0 0.0
  %250 = vmatpush1.msra.mxu0 0.0
  %251 = vmatprep.subr.mxu0 0.0
  %252 = vmatpush1.msra.mxu0 0.0
  %253 = vmatprep.subr.mxu0 0.0
  %254 = vmatpush1.msra.mxu0 0.0
  %255 = vmatprep.subr.mxu0 0.0
  %256 = vmatpush1.msra.mxu0 0.0
  %257 = vmatprep.subr.mxu0 0.0
  %258 = vmatpush1.msra.mxu0 0.0
  %259 = vmatprep.subr.mxu0 0.0
  %260 = vmatpush1.msra.mxu0 0.0
  %261 = vmatprep.subr.mxu0 0.0
  %262 = vmatpush1.msra.mxu0 0.0
  %263 = vmatprep.subr.mxu0 0.0
  %264 = vmatpush1.msra.mxu0 0.0
  %265 = vmatprep.subr.mxu0 0.0
  %266 = vmatpush1.msra.mxu0 0.0
  %267 = vmatprep.subr.mxu0 0.0
  %268 = vmatpush1.msra.mxu0 0.0
  %269 = vmatprep.subr.mxu0 0.0
  %270 = vmatpush1.msra.mxu0 0.0
  %271 = vmatprep.subr.mxu0 0.0
  %272 = vmatpush1.msra.mxu0 0.0
  %273 = vmatprep.mubr.f32.mxu0 0.0
  %274 = vmatmul.mubr.f32.gmra.mrb[0].mxu0 %v207
  %v275 = vpop.f32.mrb[0].mxu0
  %v276 = vadd.f32 %v203, %v275
  %v277 = vpop.f32.mrb[0].mxu0
  %278 = vdwg.mxu0
  %vm279 = vcmask 31744
  %280 = vst.msk [vmem:[%s7] sm:$0xff] %vm279, %v276
  // Predicated region
  $region30: #{tpu_custom_call.1} parent=0 // pred_check
    _
  $region31: #{tpu_custom_call.1} parent=0 // pred_check_branch
    %282 = sbr.rel (0) target = $region33
  $region32: #{tpu_custom_call.1} parent=0 // pred_region
    _
  $region33: #{tpu_custom_call.1} parent=0 // pred_fallthru
    _
  // Predicated region
  $region34: #{tpu_custom_call.1} parent=0 // pred_check
    _
  $region35: #{tpu_custom_call.1} parent=0 // pred_check_branch
    %284 = sbr.rel (0) target = $region37
  $region36: #{tpu_custom_call.1} parent=0 // pred_region
    _
  $region37: #{tpu_custom_call.1} parent=0 // pred_fallthru
    _

</llo_original>
